<compile_context>
chip_gen: v7x
topology: tpu7x:2x2x1
jax: 0.10.0
libtpu: 0.0.40
codegen_flags: <defaults>
</compile_context>

<pallas_src>
import functools

import jax
import jax.numpy as jnp
from jax.experimental import pallas as pl
from jax.experimental.pallas import tpu as pltpu

_LANE = 128


def _round_up(x, m):
    return ((x + m - 1) // m) * m


def _vmem_bytes_per_lane(channels, dtype):
    """Bytes one lane-column of a (channels, lanes) VMEM tile occupies (sublane-padded)."""
    itemsize = jnp.dtype(dtype).itemsize
    sublane = max(8, 32 // itemsize)          # f32 -> 8, bf16 -> 16, int8 -> 32
    return _round_up(int(channels), sublane) * itemsize


def _pick_lane_tile(extent, per_lane_bytes, *, min_tiles=1,
                    vmem_budget=8 << 20, max_lanes=65536):
    """Pick a lane tile (multiple of 128) for a streamed axis of `extent` elements.

    The tile is capped so that double-buffered (input + output) tiles stay within
    `vmem_budget`, which is kept under every generation's default scoped-VMEM limit.
    """
    ext128 = _round_up(max(int(extent), 1), _LANE)
    cap = max((vmem_budget // (2 * max(int(per_lane_bytes), 1))) // _LANE * _LANE, _LANE)
    tile = min(ext128, max_lanes, cap)
    if min_tiles > 1 and ext128 > _LANE:
        # Keep at least `min_tiles` grid steps so v7x's two TensorCores both get work.
        tile = min(tile, _round_up(pl.cdiv(ext128, min_tiles), _LANE))
    return max(tile, _LANE)


def _conv_bn_kernel(w_ref, scale_ref, shift_ref, x_ref, o_ref):
    # w_ref:     (C_out, C_in)    conv1d weight (kernel_size=1 squeezed), resident
    # scale_ref: (C_out, 1) f32   gamma / sqrt(running_var + eps), resident
    # shift_ref: (C_out, 1) f32   beta - running_mean * scale, resident
    # x_ref:     (C_in, tL)       lane tile of activations
    # o_ref:     (C_out, tL)
    y = jnp.dot(w_ref[...], x_ref[...], preferred_element_type=jnp.float32)  # conv1d, k=1 (MXU)
    y = jnp.where(y >= 0, y, 0.01 * y)                                       # F.leaky_relu (0.01)
    y = y * scale_ref[...] + shift_ref[...]                                  # BatchNorm1d (eval)
    o_ref[...] = y.astype(o_ref.dtype)                                       # Dropout(eval) == id


@functools.partial(jax.jit, static_argnames=("eps", "compute_dtype"))
def base_cnn_conv(x, conv_w, bn_gamma, bn_beta, bn_mean, bn_var,
                  eps=1e-5, compute_dtype=None):
    """x: (N, C_in, L); conv_w: (C_out, C_in, 1). Returns (N, C_out, L) in x.dtype."""
    N, C_in, L = x.shape
    C_out = conv_w.shape[0]
    assert conv_w.shape == (C_out, C_in, 1), "only kernel_size=1 Conv1d is supported"

    out_dtype = x.dtype
    # bf16 saves nothing (sublane padding) and hurts precision when C_in < 16 -> default x.dtype.
    cd = compute_dtype if compute_dtype is not None else x.dtype

    # Folded eval-mode BatchNorm affine, kept in f32 for the epilogue.
    scale1 = (bn_gamma / jnp.sqrt(bn_var + eps)).astype(jnp.float32)
    shift1 = (bn_beta - bn_mean * scale1).astype(jnp.float32)
    scale = scale1.reshape(C_out, 1)
    shift = shift1.reshape(C_out, 1)

    w2d = conv_w.reshape(C_out, C_in).astype(cd)

    per_lane = _vmem_bytes_per_lane(C_in, cd) + _vmem_bytes_per_lane(C_out, out_dtype)

    # Use the native (N, C_in, L) layout (no wrapper-side transpose/pad copies) whenever a
    # per-batch L stream is large enough to amortize per-step pipeline overhead.
    use_native = _round_up(L, _LANE) * per_lane >= (256 << 10)

    compiler_params = pltpu.CompilerParams(
        dimension_semantics=("parallel", "parallel") if use_native else ("parallel",),
        vmem_limit_bytes=32 << 20,   # headroom on v5e; <= default on v6e/v7x, < physical everywhere
    )

    if use_native:
        # Note: default cd == x.dtype, so this cast is a no-op (no extra HBM pass).
        xk = x if cd == x.dtype else x.astype(cd)
        tL = _pick_lane_tile(L, per_lane, min_tiles=2 if N == 1 else 1)
        grid = (N, pl.cdiv(L, tL))          # last L-tile may be partial; Pallas masks it
        return pl.pallas_call(
            _conv_bn_kernel,
            out_shape=jax.ShapeDtypeStruct((N, C_out, L), out_dtype),
            grid_spec=pltpu.PrefetchScalarGridSpec(
                num_scalar_prefetch=0,
                grid=grid,
                in_specs=[
                    pl.BlockSpec((C_out, C_in), lambda n, l: (0, 0)),   # weight, resident
                    pl.BlockSpec((C_out, 1), lambda n, l: (0, 0)),      # bn scale, resident
                    pl.BlockSpec((C_out, 1), lambda n, l: (0, 0)),      # bn shift, resident
                    pl.BlockSpec((None, C_in, tL), lambda n, l: (n, 0, l)),
                ],
                out_specs=pl.BlockSpec((None, C_out, tL), lambda n, l: (n, 0, l)),
            ),
            compiler_params=compiler_params,
        )(w2d, scale, shift, xk)

    # Small-L fallback: fold batch into the lane axis so stores stay lane-dense.
    NL = N * L
    NLp = _round_up(NL, _LANE)                       # pad only to the next 128 (cheap, fused)
    x2 = jnp.transpose(x, (1, 0, 2)).reshape(C_in, NL).astype(cd)
    if NLp != NL:
        x2 = jnp.pad(x2, ((0, 0), (0, NLp - NL)))

    tL = _pick_lane_tile(NLp, per_lane, min_tiles=2)
    grid = (pl.cdiv(NLp, tL),)
    out2 = pl.pallas_call(
        _conv_bn_kernel,
        out_shape=jax.ShapeDtypeStruct((C_out, NLp), out_dtype),
        grid_spec=pltpu.PrefetchScalarGridSpec(
            num_scalar_prefetch=0,
            grid=grid,
            in_specs=[
                pl.BlockSpec((C_out, C_in), lambda t: (0, 0)),   # weight, resident
                pl.BlockSpec((C_out, 1), lambda t: (0, 0)),      # bn scale, resident
                pl.BlockSpec((C_out, 1), lambda t: (0, 0)),      # bn shift, resident
                pl.BlockSpec((C_in, tL), lambda t: (0, t)),      # activations, lane tile
            ],
            out_specs=pl.BlockSpec((C_out, tL), lambda t: (0, t)),
        ),
        compiler_params=compiler_params,
    )(w2d, scale, shift, x2)

    # (C_out, N*L) -> (N, C_out, L); drop the <=127 padded lanes.
    return jnp.transpose(out2[:, :NL].reshape(C_out, N, L), (1, 0, 2))


def _reference(x, conv_w, bn_gamma, bn_beta, bn_mean, bn_var, eps=1e-5):
    w2d = conv_w.reshape(conv_w.shape[0], conv_w.shape[1]).astype(jnp.float32)
    y = jnp.einsum("oc,ncl->nol", w2d, x.astype(jnp.float32))
    y = jnp.where(y >= 0, y, 0.01 * y)
    scale = bn_gamma / jnp.sqrt(bn_var + eps)
    shift = bn_beta - bn_mean * scale
    return y * scale[None, :, None] + shift[None, :, None]


if __name__ == "__main__":
    key = jax.random.PRNGKey(0)
    k_xs, k_xb, k_w, k_g, k_b, k_m, k_v = jax.random.split(key, 7)

    N, C_in, C_out = 2, 4, 8

    # nn.Conv1d(in, out, kernel_size=1, bias=False): weight shape (C_out, C_in, 1)
    conv_w = jax.random.normal(k_w, (C_out, C_in, 1), dtype=jnp.float32) * 0.2
    # BatchNorm1d(C_out) parameters / running stats (deterministic synthetic values)
    bn_gamma = 1.0 + 0.1 * jax.random.normal(k_g, (C_out,), dtype=jnp.float32)
    bn_beta = 0.1 * jax.random.normal(k_b, (C_out,), dtype=jnp.float32)
    bn_mean = 0.05 * jax.random.normal(k_m, (C_out,), dtype=jnp.float32)
    bn_var = jnp.abs(jax.random.normal(k_v, (C_out,), dtype=jnp.float32)) + 0.5

    # Tolerance covers a possible reduced-precision MXU pass for f32 matmul inputs;
    # everything else in the kernel is exact f32.
    ATOL = RTOL = 2e-2

    # Small-L case (exercises the batch-folded lane layout path).
    L_small = 16
    x_s = jax.random.normal(k_xs, (N, C_in, L_small), dtype=jnp.float32)
    out_s = jax.block_until_ready(
        base_cnn_conv(x_s, conv_w, bn_gamma, bn_beta, bn_mean, bn_var))
    ref_s = _reference(x_s, conv_w, bn_gamma, bn_beta, bn_mean, bn_var)
    assert out_s.shape == (N, C_out, L_small)
    assert jnp.allclose(out_s, ref_s, atol=ATOL, rtol=RTOL), "small-L path mismatch vs reference"

    # Larger, non-128-multiple L (exercises the native-layout path and the partial last tile).
    L_big = 8000
    x_b = jax.random.normal(k_xb, (N, C_in, L_big), dtype=jnp.float32)
    out_b = jax.block_until_ready(
        base_cnn_conv(x_b, conv_w, bn_gamma, bn_beta, bn_mean, bn_var))
    ref_b = _reference(x_b, conv_w, bn_gamma, bn_beta, bn_mean, bn_var)
    assert out_b.shape == (N, C_out, L_big)
    assert jnp.allclose(out_b, ref_b, atol=ATOL, rtol=RTOL), "native-layout path mismatch vs reference"

    print("KERNEL_OK")
</pallas_src>

<mosaic_0001>
module attributes {stable_mosaic.version = 11 : i64} {
  func.func @_conv_bn_kernel(%arg0: i32, %arg1: memref<8x4xf32, #tpu.memory_space<vmem>>, %arg2: memref<8x1xf32, #tpu.memory_space<vmem>>, %arg3: memref<8x1xf32, #tpu.memory_space<vmem>>, %arg4: memref<4x128xf32, #tpu.memory_space<vmem>>, %arg5: memref<8x128xf32, #tpu.memory_space<vmem>>) attributes {dimension_semantics = [#tpu.dimension_semantics<parallel>], iteration_bounds = array<i64: 1>, scalar_prefetch = 0 : i64, scratch_operands = 0 : i64, tpu.core_type = #tpu.core_type<tc>, window_params = [{pipeline_mode = #tpu.pipeline_mode<synchronous>, transform_indices = @transform_0, window_bounds = array<i64: 8, 4>}, {pipeline_mode = #tpu.pipeline_mode<synchronous>, transform_indices = @transform_1, window_bounds = array<i64: 8, 1>}, {pipeline_mode = #tpu.pipeline_mode<synchronous>, transform_indices = @transform_2, window_bounds = array<i64: 8, 1>}, {transform_indices = @transform_3, window_bounds = array<i64: 4, 128>}, {transform_indices = @transform_4, window_bounds = array<i64: 8, 128>}]} {
    %c0 = arith.constant 0 : index
    %c0_0 = arith.constant 0 : index
    %0 = vector.load %arg1[%c0, %c0_0] : memref<8x4xf32, #tpu.memory_space<vmem>>, vector<8x4xf32>
    %c0_1 = arith.constant 0 : index
    %c0_2 = arith.constant 0 : index
    %1 = vector.load %arg4[%c0_1, %c0_2] : memref<4x128xf32, #tpu.memory_space<vmem>>, vector<4x128xf32>
    %cst = arith.constant dense<0.000000e+00> : vector<8x128xf32>
    %2 = tpu.matmul %0, %1, %cst {dimension_numbers = #tpu.dot_dimension_numbers<[1], [0], [0], [1], [0, 0, 1, 1], [], []>} : vector<8x4xf32>, vector<4x128xf32>, vector<8x128xf32> -> vector<8x128xf32>
    %cst_3 = arith.constant 0.000000e+00 : f32
    %3 = vector.broadcast %cst_3 : f32 to vector<8x128xf32>
    %4 = arith.cmpf oge, %2, %3 : vector<8x128xf32>
    %cst_4 = arith.constant 0.00999999977 : f32
    %5 = vector.broadcast %cst_4 : f32 to vector<8x128xf32>
    %6 = arith.mulf %5, %2 : vector<8x128xf32>
    %7 = arith.select %4, %2, %6 : vector<8x128xi1>, vector<8x128xf32>
    %c0_5 = arith.constant 0 : index
    %c0_6 = arith.constant 0 : index
    %8 = vector.load %arg2[%c0_5, %c0_6] : memref<8x1xf32, #tpu.memory_space<vmem>>, vector<8x1xf32>
    %9 = vector.broadcast %8 : vector<8x1xf32> to vector<8x128xf32>
    %10 = arith.mulf %7, %9 : vector<8x128xf32>
    %c0_7 = arith.constant 0 : index
    %c0_8 = arith.constant 0 : index
    %11 = vector.load %arg3[%c0_7, %c0_8] : memref<8x1xf32, #tpu.memory_space<vmem>>, vector<8x1xf32>
    %12 = vector.broadcast %11 : vector<8x1xf32> to vector<8x128xf32>
    %13 = arith.addf %10, %12 : vector<8x128xf32>
    %c0_9 = arith.constant 0 : index
    %c0_10 = arith.constant 0 : index
    %14 = vector.load %arg5[%c0_9, %c0_10] : memref<8x128xf32, #tpu.memory_space<vmem>>, vector<8x128xf32>
    tpu.vector_store %arg5[%c0_9, %c0_10], %13 {strides = array<i32>} : memref<8x128xf32, #tpu.memory_space<vmem>>, vector<8x128xf32>,
    return
  }
  func.func @transform_0(%arg0: i32) -> (i32, i32) {
    %c0_i32 = arith.constant 0 : i32
    %c0_i32_0 = arith.constant 0 : i32
    %c0_i32_1 = arith.constant 0 : i32
    return %c0_i32, %c0_i32_0 : i32, i32
  }
  func.func @transform_1(%arg0: i32) -> (i32, i32) {
    %c0_i32 = arith.constant 0 : i32
    %c0_i32_0 = arith.constant 0 : i32
    %c0_i32_1 = arith.constant 0 : i32
    return %c0_i32, %c0_i32_0 : i32, i32
  }
  func.func @transform_2(%arg0: i32) -> (i32, i32) {
    %c0_i32 = arith.constant 0 : i32
    %c0_i32_0 = arith.constant 0 : i32
    %c0_i32_1 = arith.constant 0 : i32
    return %c0_i32, %c0_i32_0 : i32, i32
  }
  func.func @transform_3(%arg0: i32) -> (i32, i32) {
    %c0_i32 = arith.constant 0 : i32
    %c0_i32_0 = arith.constant 0 : i32
    return %c0_i32, %arg0 : i32, i32
  }
  func.func @transform_4(%arg0: i32) -> (i32, i32) {
    %c0_i32 = arith.constant 0 : i32
    %c0_i32_0 = arith.constant 0 : i32
    return %c0_i32, %arg0 : i32, i32
  }
}

</mosaic_0001>

<llo_original>
// kernel: base_cnn_conv.1
$region0: #{base_cnn_conv.1}
  #allocation0 [shape = 'u32[]', space=smem, size = 0x4, offset = 0x4, fixed_abs, tag = 'smem constant byte address 0x4 - core index']
  #allocation1 [shape = 'u32[144,128]{1,0:T(1,128)}', space=vmem, size = 0x12000, scoped, tag = 'internal scratch']
  %s0 = inlined_call_operand.vmem [shape: f32[8,4], index: 0, kind: input, shape index: {}]
  %s1 = inlined_call_operand.vmem [shape: f32[8,1], index: 1, kind: input, shape index: {}]
  %s2 = inlined_call_operand.vmem [shape: f32[8,1], index: 2, kind: input, shape index: {}]
  %s3 = inlined_call_operand.vmem [shape: f32[4,128], index: 3, kind: input, shape index: {}]
  %s4 = inlined_call_operand.vmem [shape: f32[8,128], index: 4, kind: output, shape index: {}]
  %s5 = sld [smem:[#allocation0]]
  $region26: #{base_cnn_conv.1} parent=0
    _
  %s7 = ssub.s32 1, %s5
  %s8 = scalar_select 0, %s7, %s5
  // Predicated region
  $region2: #{base_cnn_conv.1} parent=0 // pred_check
    _
  $region3: #{base_cnn_conv.1} parent=0 // pred_check_branch
    %10 = sbr.rel (0) target = $region5
  $region4: #{base_cnn_conv.1} parent=0 // pred_region
    _
  $region5: #{base_cnn_conv.1} parent=0 // pred_fallthru
    _
  // Predicated region
  $region6: #{base_cnn_conv.1} parent=0 // pred_check
    _
  $region7: #{base_cnn_conv.1} parent=0 // pred_check_branch
    %12 = sbr.rel (0) target = $region9
  $region8: #{base_cnn_conv.1} parent=0 // pred_region
    _
  $region9: #{base_cnn_conv.1} parent=0 // pred_fallthru
    _
  // Predicated region
  $region10: #{base_cnn_conv.1} parent=0 // pred_check
    _
  $region11: #{base_cnn_conv.1} parent=0 // pred_check_branch
    %14 = sbr.rel (0) target = $region13
  $region12: #{base_cnn_conv.1} parent=0 // pred_region
    _
  $region13: #{base_cnn_conv.1} parent=0 // pred_fallthru
    _
  // Predicated region
  $region14: #{base_cnn_conv.1} parent=0 // pred_check
    _
  $region15: #{base_cnn_conv.1} parent=0 // pred_check_branch
    %16 = sbr.rel (0) target = $region17
  $region16: #{base_cnn_conv.1} parent=0 // pred_region
    _
  $region17: #{base_cnn_conv.1} parent=0 // pred_fallthru
    _
  %v17 = vld [vmem:[%s0] sm:$0xff]
  %v18 = vld [vmem:[%s3] sm:$0xf]
  %vm19 = vcmask 31744
  %v21 = vsel %vm19, %v17, 0
  %vm23 = vcmask 1043456
  %v25 = vsel %vm23, %v18, 0
  %27 = vmatprep.subr.mxu0 0.0
  %28 = vmatpush1.msra.mxu0 %v25
  %29 = vmatprep.subr.mxu0 0.0
  %30 = vmatpush1.msra.mxu0 0.0
  %31 = vmatprep.subr.mxu0 0.0
  %32 = vmatpush1.msra.mxu0 0.0
  %33 = vmatprep.subr.mxu0 0.0
  %34 = vmatpush1.msra.mxu0 0.0
  %35 = vmatprep.subr.mxu0 0.0
  %36 = vmatpush1.msra.mxu0 0.0
  %37 = vmatprep.subr.mxu0 0.0
  %38 = vmatpush1.msra.mxu0 0.0
  %39 = vmatprep.subr.mxu0 0.0
  %40 = vmatpush1.msra.mxu0 0.0
  %41 = vmatprep.subr.mxu0 0.0
  %42 = vmatpush1.msra.mxu0 0.0
  %43 = vmatprep.subr.mxu0 0.0
  %44 = vmatpush1.msra.mxu0 0.0
  %45 = vmatprep.subr.mxu0 0.0
  %46 = vmatpush1.msra.mxu0 0.0
  %47 = vmatprep.subr.mxu0 0.0
  %48 = vmatpush1.msra.mxu0 0.0
  %49 = vmatprep.subr.mxu0 0.0
  %50 = vmatpush1.msra.mxu0 0.0
  %51 = vmatprep.subr.mxu0 0.0
  %52 = vmatpush1.msra.mxu0 0.0
  %53 = vmatprep.subr.mxu0 0.0
  %54 = vmatpush1.msra.mxu0 0.0
  %55 = vmatprep.subr.mxu0 0.0
  %56 = vmatpush1.msra.mxu0 0.0
  %57 = vmatprep.subr.mxu0 0.0
  %58 = vmatpush1.msra.mxu0 0.0
  %59 = vmatprep.subr.mxu0 0.0
  %60 = vmatpush1.msra.mxu0 0.0
  %61 = vmatprep.subr.mxu0 0.0
  %62 = vmatpush1.msra.mxu0 0.0
  %63 = vmatprep.subr.mxu0 0.0
  %64 = vmatpush1.msra.mxu0 0.0
  %65 = vmatprep.subr.mxu0 0.0
  %66 = vmatpush1.msra.mxu0 0.0
  %67 = vmatprep.subr.mxu0 0.0
  %68 = vmatpush1.msra.mxu0 0.0
  %69 = vmatprep.subr.mxu0 0.0
  %70 = vmatpush1.msra.mxu0 0.0
  %71 = vmatprep.subr.mxu0 0.0
  %72 = vmatpush1.msra.mxu0 0.0
  %73 = vmatprep.subr.mxu0 0.0
  %74 = vmatpush1.msra.mxu0 0.0
  %75 = vmatprep.subr.mxu0 0.0
  %76 = vmatpush1.msra.mxu0 0.0
  %77 = vmatprep.subr.mxu0 0.0
  %78 = vmatpush1.msra.mxu0 0.0
  %79 = vmatprep.subr.mxu0 0.0
  %80 = vmatpush1.msra.mxu0 0.0
  %81 = vmatprep.subr.mxu0 0.0
  %82 = vmatpush1.msra.mxu0 0.0
  %83 = vmatprep.subr.mxu0 0.0
  %84 = vmatpush1.msra.mxu0 0.0
  %85 = vmatprep.subr.mxu0 0.0
  %86 = vmatpush1.msra.mxu0 0.0
  %87 = vmatprep.subr.mxu0 0.0
  %88 = vmatpush1.msra.mxu0 0.0
  %89 = vmatprep.subr.mxu0 0.0
  %90 = vmatpush1.msra.mxu0 0.0
  %91 = vmatprep.mubr.f32.mxu0 0.0
  %92 = vmatmul.mubr.f32.gmra.mrb[0].mxu0 %v21
  %v93 = vpop.f32.mrb[0].mxu0
  %v94 = vadd.f32 0.0, %v93
  %v95 = vpop.f32.mrb[0].mxu0
  %96 = vdwg.mxu0
  %vm97 = vcmp.ge.f32.partialorder %v94, 0.0
  %v98 = vmul.f32 %v94, 0.01
  %v99 = vsel %vm97, %v94, %v98
  %v100 = vld [vmem:[%s1] sm:$0xff]
  %102 = vset.pattern.permute.xlu0 0
  %103 = vperm.xlu0 %102, %v100
  %v104 = vpop.permute.xlu0 %103
  %v106 = vmul.f32 %v99, %v104
  %v107 = vld [vmem:[%s2] sm:$0xff]
  %109 = vset.pattern.permute.xlu0 0
  %110 = vperm.xlu0 %109, %v107
  %v111 = vpop.permute.xlu0 %110
  %v113 = vadd.f32 %v106, %v111
  %114 = vst [vmem:[%s4] sm:$0xff] %v113
  // Predicated region
  $region18: #{base_cnn_conv.1} parent=0 // pred_check
    _
  $region19: #{base_cnn_conv.1} parent=0 // pred_check_branch
    %116 = sbr.rel (0) target = $region21
  $region20: #{base_cnn_conv.1} parent=0 // pred_region
    _
  $region21: #{base_cnn_conv.1} parent=0 // pred_fallthru
    _
  // Predicated region
  $region22: #{base_cnn_conv.1} parent=0 // pred_check
    _
  $region23: #{base_cnn_conv.1} parent=0 // pred_check_branch
    %118 = sbr.rel (0) target = $region25
  $region24: #{base_cnn_conv.1} parent=0 // pred_region
    _
  $region25: #{base_cnn_conv.1} parent=0 // pred_fallthru
    _

</llo_original>
